<compile_context>
chip_gen: v7x
topology: tpu7x:2x2x1
jax: 0.10.0
libtpu: 0.0.40
codegen_flags: <defaults>
</compile_context>

<pallas_src>
import jax
import jax.numpy as jnp
from jax.experimental import pallas as pl
from jax.experimental.pallas import tpu as pltpu


# ---------------------------------------------------------------------------
# Device heuristics (best effort; safe defaults if detection fails).
# ---------------------------------------------------------------------------

def _tpu_kind():
    try:
        d = jax.devices()[0]
        if d.platform == "tpu":
            return str(getattr(d, "device_kind", "")).lower()
    except Exception:
        pass
    return ""


def _default_num_shards():
    # v7x has 2 TensorCores per chip: issue/own DMA chunks from both cores.
    # Do NOT shard on 1-TC chips (v5e/v6e) -- it only adds grid-step overhead.
    kind = _tpu_kind()
    if "v7" in kind or "7x" in kind:
        return 2
    return 1


def _default_max_chunks():
    # v5e reaches its HBM copy roofline with modest DMA concurrency; extra
    # descriptors/semaphores are pure overhead there.
    kind = _tpu_kind()
    if "v5" in kind:
        return 8
    return 16


# ---------------------------------------------------------------------------
# Pure-DMA path: chunked HBM -> HBM copies.
# ---------------------------------------------------------------------------

def _chunk_plan(lane_offsets, lane_sizes, pre, itemsize,
                target_chunk_bytes, max_total_chunks):
    """Split each input's lane range into ~target_chunk_bytes chunks.

    Returns a list of (input_index, src_lane_start, dst_lane_start, lane_len).
    Chunk boundaries are snapped down to multiples of 128 lanes so sub-copies
    stay tile aligned whenever the sizes allow it.
    """
    per_input = []
    for sz in lane_sizes:
        b = pre * sz * itemsize
        per_input.append(max(1, -(-b // target_chunk_bytes)))  # ceil div
    total = sum(per_input)
    if total > max_total_chunks:
        scale = max_total_chunks / total
        per_input = [max(1, int(n * scale)) for n in per_input]

    chunks = []
    for i, (off, sz, n) in enumerate(zip(lane_offsets, lane_sizes, per_input)):
        bounds = [0]
        for c in range(1, n):
            b = ((c * sz) // n // 128) * 128
            bounds.append(b)
        bounds.append(sz)
        for c in range(n):
            s0, s1 = bounds[c], bounds[c + 1]
            if s1 > s0:
                chunks.append((i, s0, off + s0, s1 - s0))
    return chunks


def _make_join_dma_kernel(chunks, num_inputs, num_shards):
    """One async HBM->HBM copy per chunk into its output lane slice.

    All copies owned by a shard are started before any wait, so they are in
    flight concurrently.  When num_shards > 1 the chunk list is split
    round-robin across a size-`num_shards` "parallel" grid axis so each
    TensorCore issues/owns its own copies (v7x).  Every chunk gets its own
    semaphore slot (disjoint per shard).
    """
    shards = [chunks[s::num_shards] for s in range(num_shards)]
    slots_per_shard = max(1, max(len(s) for s in shards))

    def _emit(in_refs, out_ref, sem, chunk_subset, sem_base):
        copies = []
        for slot, (i, s0, d0, ln) in enumerate(chunk_subset):
            cp = pltpu.make_async_copy(
                in_refs[i].at[:, s0:s0 + ln],
                out_ref.at[:, d0:d0 + ln],
                sem.at[sem_base + slot])
            cp.start()
            copies.append(cp)
        for cp in copies:
            cp.wait()

    def kernel(*refs):
        in_refs = refs[:num_inputs]
        out_ref = refs[num_inputs]
        sem = refs[num_inputs + 1]
        if num_shards == 1:
            _emit(in_refs, out_ref, sem, shards[0], 0)
        else:
            sid = pl.program_id(0)
            for s, sub in enumerate(shards):
                if not sub:
                    continue

                @pl.when(sid == s)
                def _(sub=sub, s=s):
                    _emit(in_refs, out_ref, sem, sub, s * slots_per_shard)

    return kernel, num_shards * slots_per_shard


def _join_dma(flat, lane_offsets, lane_sizes, pre, total_lanes, out_dtype,
              num_shards, target_chunk_bytes, max_total_chunks):
    itemsize = jnp.dtype(out_dtype).itemsize
    chunks = _chunk_plan(lane_offsets, lane_sizes, pre, itemsize,
                         target_chunk_bytes, max_total_chunks)
    kernel, num_slots = _make_join_dma_kernel(chunks, len(flat), num_shards)
    total_bytes = pre * total_lanes * itemsize

    cp_kwargs = dict(has_side_effects=True)
    call_kwargs = dict(
        out_shape=jax.ShapeDtypeStruct((pre, total_lanes), out_dtype),
        # Leave everything in place (HBM): no auto-DMA, no VMEM round trip.
        in_specs=[pl.BlockSpec(memory_space=pl.ANY) for _ in flat],
        out_specs=pl.BlockSpec(memory_space=pl.ANY),
        scratch_shapes=[pltpu.SemaphoreType.DMA((num_slots,))],
        cost_estimate=pl.CostEstimate(
            flops=0, transcendentals=0, bytes_accessed=2 * total_bytes),
    )
    if num_shards > 1:
        call_kwargs["grid"] = (num_shards,)
        cp_kwargs["dimension_semantics"] = ("parallel",)
    call_kwargs["compiler_params"] = pltpu.CompilerParams(**cp_kwargs)

    return pl.pallas_call(kernel, **call_kwargs)(*flat)


# ---------------------------------------------------------------------------
# VMEM-staged path for short strided runs (tiny per-input row slabs).
# ---------------------------------------------------------------------------

def _make_join_vmem_kernel(lane_offsets, lane_sizes, num_inputs):
    def kernel(*refs):
        in_refs = refs[:num_inputs]
        out_ref = refs[num_inputs]
        for src, off, sz in zip(in_refs, lane_offsets, lane_sizes):
            out_ref[:, off:off + sz] = src[...]
    return kernel


def _join_vmem(flat, lane_offsets, lane_sizes, pre, total_lanes, out_dtype):
    itemsize = jnp.dtype(out_dtype).itemsize
    row_bytes = total_lanes * itemsize
    # in-blocks + out-block, double buffered -> ~4x row traffic resident per
    # block row.  Budget sized for v7x's smaller (64 MiB) VMEM.
    budget = 8 << 20
    if pre * row_bytes * 4 <= budget:
        tp = pre
    else:
        tp = max(8, (budget // (4 * row_bytes)) // 8 * 8)
        tp = min(tp, pre)
    if tp * row_bytes * 4 > (12 << 20):
        return None  # infeasible tiling; caller falls back to XLA concat

    grid = (pl.cdiv(pre, tp),)
    kernel = _make_join_vmem_kernel(lane_offsets, lane_sizes, len(flat))
    return pl.pallas_call(
        kernel,
        out_shape=jax.ShapeDtypeStruct((pre, total_lanes), out_dtype),
        grid=grid,
        in_specs=[pl.BlockSpec((tp, sz), lambda p: (p, 0)) for sz in lane_sizes],
        out_specs=pl.BlockSpec((tp, total_lanes), lambda p: (p, 0)),
        compiler_params=pltpu.CompilerParams(
            dimension_semantics=("parallel",)),
    )(*flat)


# ---------------------------------------------------------------------------
# Public wrapper: JoinList.forward equivalents.
# ---------------------------------------------------------------------------

def join_list(xs, dimension=1, *,
              num_shards=None,
              min_pallas_bytes=1 << 20,
              min_dma_run_bytes=512,
              target_chunk_bytes=2 << 20,
              max_total_chunks=None):
    """Pallas equivalent of JoinList.forward (is_rejuvenated == 0 path):
       torch.cat([e for e in xs if e is not None], dimension)."""
    valid = [x for x in xs if x is not None]
    assert valid, "JoinList requires at least one non-None input"

    ndim = valid[0].ndim
    dim = dimension % ndim

    # Shape validation: all non-concat dims must match.
    ref_shape = valid[0].shape
    for x in valid:
        assert x.ndim == ndim, "JoinList inputs must have the same rank"
        assert all(x.shape[a] == ref_shape[a] for a in range(ndim) if a != dim), (
            "JoinList inputs must match on all non-concat dims")

    if len(valid) == 1:
        return valid[0]

    out_shape_nd = list(ref_shape)
    out_shape_nd[dim] = sum(int(x.shape[dim]) for x in valid)
    out_shape_nd = tuple(out_shape_nd)

    # Mixed dtypes: wrapper-side astype would add a hidden full HBM read+write
    # per converted input, so let XLA's native concatenate handle the
    # promotion (it fuses the converts with the copy).
    dtypes = {jnp.dtype(x.dtype) for x in valid}
    if len(dtypes) > 1:
        return jnp.concatenate(valid, axis=dim)
    out_dtype = valid[0].dtype
    itemsize = jnp.dtype(out_dtype).itemsize

    # Flatten to a 2-D view: (pre, C_i * post).  Row-major layout makes the
    # concat along `dim` identical to a concat along the flattened trailing
    # axis.  (Assumes default row-major XLA layouts.)
    pre = 1
    for a in range(dim):
        pre *= ref_shape[a]
    post = 1
    for a in range(dim + 1, ndim):
        post *= ref_shape[a]

    lane_sizes = [int(x.shape[dim]) * post for x in valid]
    lane_offsets, acc = [], 0
    for s in lane_sizes:
        lane_offsets.append(acc)
        acc += s
    total_lanes = acc
    total_bytes = pre * total_lanes * itemsize

    # Tiny joins: fixed pallas_call launch cost dominates, and XLA's native
    # concatenate can fuse with producers/consumers.
    if total_bytes < min_pallas_bytes:
        return jnp.concatenate(valid, axis=dim)

    flat = [x.reshape(pre, s) for x, s in zip(valid, lane_sizes)]

    # Short strided runs (pre > 1 with < ~512 B per row per input) waste HBM
    # bursts on the pure-DMA path -> stage through VMEM with a lane-dense
    # output block instead.
    if pre > 1 and min(lane_sizes) * itemsize < min_dma_run_bytes:
        out2d = _join_vmem(flat, lane_offsets, lane_sizes, pre, total_lanes,
                           out_dtype)
        if out2d is None:
            return jnp.concatenate(valid, axis=dim)
        return out2d.reshape(out_shape_nd)

    if num_shards is None:
        num_shards = _default_num_shards()
    num_shards = max(1, int(num_shards))
    if max_total_chunks is None:
        max_total_chunks = _default_max_chunks()

    out2d = _join_dma(flat, lane_offsets, lane_sizes, pre, total_lanes,
                      out_dtype, num_shards, target_chunk_bytes,
                      max_total_chunks)
    return out2d.reshape(out_shape_nd)


def join_list_rejuvenated(pairs, dimension=1):
    """is_rejuvenated == 1 path: concat live and dead lists independently."""
    live = [p[0] for p in pairs if p[0] is not None]
    dead = [p[1] for p in pairs if p[1] is not None]
    return [join_list(live, dimension), join_list(dead, dimension)]


# TODO(synk): at the module level the concat can be removed entirely by having
# producer kernels write their features directly into channel offsets of a
# preallocated joined buffer (input_output_aliases / offset out_specs); kept as
# a standalone op here to preserve JoinList's interface.


def _ref_concat(xs, dim):
    return jnp.concatenate([x for x in xs if x is not None], axis=dim)


if __name__ == "__main__":
    key = jax.random.PRNGKey(0)
    k = jax.random.split(key, 8)

    # 1) Densenet-style NCHW channel concat on the pure-DMA path (force the
    #    Pallas kernel past the small-size escape hatch for the demo).
    x1 = jax.random.normal(k[0], (2, 4, 16, 16), dtype=jnp.float32)
    x2 = jax.random.normal(k[1], (2, 3, 16, 16), dtype=jnp.float32)
    x3 = jax.random.normal(k[2], (2, 5, 16, 16), dtype=jnp.float32)
    xs = [x1, None, x2, x3]                      # JoinList skips None entries
    out = join_list(xs, dimension=1, min_pallas_bytes=0)
    out = jax.block_until_ready(out)
    assert out.shape == (2, 12, 16, 16), out.shape
    assert jnp.array_equal(out, _ref_concat(xs, 1)), "DMA path mismatch"

    # 2) Chunked + sharded DMA path (small chunk target so several copies are
    #    in flight; num_shards=2 exercises the grid/core-split kernel -- it is
    #    correct on 1-TC chips too, just sequential there).
    y1 = jax.random.normal(k[3], (2, 16, 16, 16), dtype=jnp.float32)
    y2 = jax.random.normal(k[4], (2, 8, 16, 16), dtype=jnp.float32)
    y3 = jax.random.normal(k[5], (2, 24, 16, 16), dtype=jnp.float32)
    ys = [y1, y2, y3]
    out = join_list(ys, dimension=1, min_pallas_bytes=0, num_shards=2,
                    target_chunk_bytes=8 << 10, max_total_chunks=16)
    out = jax.block_until_ready(out)
    assert jnp.array_equal(out, _ref_concat(ys, 1)), "chunked/sharded mismatch"

    # 3) Short-run shapes route through the VMEM-staged blocked kernel.
    z1 = jax.random.normal(k[6], (64, 3, 4, 4), dtype=jnp.float32)
    z2 = jax.random.normal(k[7], (64, 2, 4, 4), dtype=jnp.float32)
    zs = [z1, z2]
    out = join_list(zs, dimension=1, min_pallas_bytes=0)
    out = jax.block_until_ready(out)
    assert out.shape == (64, 5, 4, 4), out.shape
    assert jnp.array_equal(out, _ref_concat(zs, 1)), "VMEM path mismatch"

    # 4) Tiny / mixed-dtype joins take the XLA concatenate escape hatch.
    out = join_list([x1, x2.astype(jnp.bfloat16)], dimension=1)
    out = jax.block_until_ready(out)
    assert out.shape == (2, 7, 16, 16)
    assert out.dtype == jnp.result_type(jnp.float32, jnp.bfloat16)

    # 5) is_rejuvenated == 1 path.
    w1 = x1 * 2.0
    live_out, dead_out = join_list_rejuvenated(
        [(x1, w1), (x2, None), (None, x3)], dimension=1)
    live_out = jax.block_until_ready(live_out)
    dead_out = jax.block_until_ready(dead_out)
    assert live_out.shape == (2, 7, 16, 16)
    assert dead_out.shape == (2, 9, 16, 16)
    assert jnp.array_equal(live_out, jnp.concatenate([x1, x2], axis=1))
    assert jnp.array_equal(dead_out, jnp.concatenate([w1, x3], axis=1))

    print("KERNEL_OK")
</pallas_src>

<mosaic_0001>
module attributes {stable_mosaic.version = 11 : i64} {
  func.func @kernel(%arg0: memref<2x1024xf32, #tpu.memory_space<any>>, %arg1: memref<2x768xf32, #tpu.memory_space<any>>, %arg2: memref<2x1280xf32, #tpu.memory_space<any>>, %arg3: memref<2x3072xf32, #tpu.memory_space<any>>, %arg4: memref<3x!tpu.dma_semaphore, #tpu.memory_space<semaphore_mem>>) attributes {dimension_semantics = [], scalar_prefetch = 0 : i64, scratch_operands = 1 : i64, tpu.core_type = #tpu.core_type<tc>} {
    %c0_i32 = arith.constant 0 : i32
    %c0_i32_0 = arith.constant 0 : i32
    %c0_i32_1 = arith.constant 0 : i32
    %0 = tpu.memref_slice %arg0[%c0_i32_0, %c0_i32_1] : memref<2x1024xf32, #tpu.memory_space<any>> -> memref<2x1024xf32, #tpu.memory_space<any>>
    %c0_i32_2 = arith.constant 0 : i32
    %c0_i32_3 = arith.constant 0 : i32
    %1 = tpu.memref_slice %arg3[%c0_i32_2, %c0_i32_3] : memref<2x3072xf32, #tpu.memory_space<any>> -> memref<2x1024xf32, #tpu.memory_space<any>>
    %2 = tpu.memref_slice %arg4[%c0_i32] : memref<3x!tpu.dma_semaphore, #tpu.memory_space<semaphore_mem>> -> memref<1x!tpu.dma_semaphore, #tpu.memory_space<semaphore_mem>>
    %3 = tpu.memref_squeeze %2 : memref<1x!tpu.dma_semaphore, #tpu.memory_space<semaphore_mem>> -> memref<!tpu.dma_semaphore, #tpu.memory_space<semaphore_mem>>
    tpu.enqueue_dma source(%0 : memref<2x1024xf32, #tpu.memory_space<any>>) target(%1 : memref<2x1024xf32, #tpu.memory_space<any>>) target_semaphore(%3 : memref<!tpu.dma_semaphore, #tpu.memory_space<semaphore_mem>>)
    %c1_i32 = arith.constant 1 : i32
    %c0_i32_4 = arith.constant 0 : i32
    %c0_i32_5 = arith.constant 0 : i32
    %4 = tpu.memref_slice %arg1[%c0_i32_4, %c0_i32_5] : memref<2x768xf32, #tpu.memory_space<any>> -> memref<2x768xf32, #tpu.memory_space<any>>
    %c0_i32_6 = arith.constant 0 : i32
    %c1024_i32 = arith.constant 1024 : i32
    %5 = tpu.memref_slice %arg3[%c0_i32_6, %c1024_i32] : memref<2x3072xf32, #tpu.memory_space<any>> -> memref<2x768xf32, #tpu.memory_space<any>>
    %6 = tpu.memref_slice %arg4[%c1_i32] : memref<3x!tpu.dma_semaphore, #tpu.memory_space<semaphore_mem>> -> memref<1x!tpu.dma_semaphore, #tpu.memory_space<semaphore_mem>>
    %7 = tpu.memref_squeeze %6 : memref<1x!tpu.dma_semaphore, #tpu.memory_space<semaphore_mem>> -> memref<!tpu.dma_semaphore, #tpu.memory_space<semaphore_mem>>
    tpu.enqueue_dma source(%4 : memref<2x768xf32, #tpu.memory_space<any>>) target(%5 : memref<2x768xf32, #tpu.memory_space<any>>) target_semaphore(%7 : memref<!tpu.dma_semaphore, #tpu.memory_space<semaphore_mem>>)
    %c2_i32 = arith.constant 2 : i32
    %c0_i32_7 = arith.constant 0 : i32
    %c0_i32_8 = arith.constant 0 : i32
    %8 = tpu.memref_slice %arg2[%c0_i32_7, %c0_i32_8] : memref<2x1280xf32, #tpu.memory_space<any>> -> memref<2x1280xf32, #tpu.memory_space<any>>
    %c0_i32_9 = arith.constant 0 : i32
    %c1792_i32 = arith.constant 1792 : i32
    %9 = tpu.memref_slice %arg3[%c0_i32_9, %c1792_i32] : memref<2x3072xf32, #tpu.memory_space<any>> -> memref<2x1280xf32, #tpu.memory_space<any>>
    %10 = tpu.memref_slice %arg4[%c2_i32] : memref<3x!tpu.dma_semaphore, #tpu.memory_space<semaphore_mem>> -> memref<1x!tpu.dma_semaphore, #tpu.memory_space<semaphore_mem>>
    %11 = tpu.memref_squeeze %10 : memref<1x!tpu.dma_semaphore, #tpu.memory_space<semaphore_mem>> -> memref<!tpu.dma_semaphore, #tpu.memory_space<semaphore_mem>>
    tpu.enqueue_dma source(%8 : memref<2x1280xf32, #tpu.memory_space<any>>) target(%9 : memref<2x1280xf32, #tpu.memory_space<any>>) target_semaphore(%11 : memref<!tpu.dma_semaphore, #tpu.memory_space<semaphore_mem>>)
    %c0_i32_10 = arith.constant 0 : i32
    %c0_i32_11 = arith.constant 0 : i32
    %c0_i32_12 = arith.constant 0 : i32
    %12 = tpu.memref_slice %arg0[%c0_i32_11, %c0_i32_12] : memref<2x1024xf32, #tpu.memory_space<any>> -> memref<2x1024xf32, #tpu.memory_space<any>>
    %c0_i32_13 = arith.constant 0 : i32
    %c0_i32_14 = arith.constant 0 : i32
    %13 = tpu.memref_slice %arg3[%c0_i32_13, %c0_i32_14] : memref<2x3072xf32, #tpu.memory_space<any>> -> memref<2x1024xf32, #tpu.memory_space<any>>
    %14 = tpu.memref_slice %arg4[%c0_i32_10] : memref<3x!tpu.dma_semaphore, #tpu.memory_space<semaphore_mem>> -> memref<1x!tpu.dma_semaphore, #tpu.memory_space<semaphore_mem>>
    %15 = tpu.memref_squeeze %14 : memref<1x!tpu.dma_semaphore, #tpu.memory_space<semaphore_mem>> -> memref<!tpu.dma_semaphore, #tpu.memory_space<semaphore_mem>>
    tpu.wait_dma2 semaphore(%15 : memref<!tpu.dma_semaphore, #tpu.memory_space<semaphore_mem>>) src(%12 : memref<2x1024xf32, #tpu.memory_space<any>>) dst(%13 : memref<2x1024xf32, #tpu.memory_space<any>>)
    %c1_i32_15 = arith.constant 1 : i32
    %c0_i32_16 = arith.constant 0 : i32
    %c0_i32_17 = arith.constant 0 : i32
    %16 = tpu.memref_slice %arg1[%c0_i32_16, %c0_i32_17] : memref<2x768xf32, #tpu.memory_space<any>> -> memref<2x768xf32, #tpu.memory_space<any>>
    %c0_i32_18 = arith.constant 0 : i32
    %c1024_i32_19 = arith.constant 1024 : i32
    %17 = tpu.memref_slice %arg3[%c0_i32_18, %c1024_i32_19] : memref<2x3072xf32, #tpu.memory_space<any>> -> memref<2x768xf32, #tpu.memory_space<any>>
    %18 = tpu.memref_slice %arg4[%c1_i32_15] : memref<3x!tpu.dma_semaphore, #tpu.memory_space<semaphore_mem>> -> memref<1x!tpu.dma_semaphore, #tpu.memory_space<semaphore_mem>>
    %19 = tpu.memref_squeeze %18 : memref<1x!tpu.dma_semaphore, #tpu.memory_space<semaphore_mem>> -> memref<!tpu.dma_semaphore, #tpu.memory_space<semaphore_mem>>
    tpu.wait_dma2 semaphore(%19 : memref<!tpu.dma_semaphore, #tpu.memory_space<semaphore_mem>>) src(%16 : memref<2x768xf32, #tpu.memory_space<any>>) dst(%17 : memref<2x768xf32, #tpu.memory_space<any>>)
    %c2_i32_20 = arith.constant 2 : i32
    %c0_i32_21 = arith.constant 0 : i32
    %c0_i32_22 = arith.constant 0 : i32
    %20 = tpu.memref_slice %arg2[%c0_i32_21, %c0_i32_22] : memref<2x1280xf32, #tpu.memory_space<any>> -> memref<2x1280xf32, #tpu.memory_space<any>>
    %c0_i32_23 = arith.constant 0 : i32
    %c1792_i32_24 = arith.constant 1792 : i32
    %21 = tpu.memref_slice %arg3[%c0_i32_23, %c1792_i32_24] : memref<2x3072xf32, #tpu.memory_space<any>> -> memref<2x1280xf32, #tpu.memory_space<any>>
    %22 = tpu.memref_slice %arg4[%c2_i32_20] : memref<3x!tpu.dma_semaphore, #tpu.memory_space<semaphore_mem>> -> memref<1x!tpu.dma_semaphore, #tpu.memory_space<semaphore_mem>>
    %23 = tpu.memref_squeeze %22 : memref<1x!tpu.dma_semaphore, #tpu.memory_space<semaphore_mem>> -> memref<!tpu.dma_semaphore, #tpu.memory_space<semaphore_mem>>
    tpu.wait_dma2 semaphore(%23 : memref<!tpu.dma_semaphore, #tpu.memory_space<semaphore_mem>>) src(%20 : memref<2x1280xf32, #tpu.memory_space<any>>) dst(%21 : memref<2x1280xf32, #tpu.memory_space<any>>)
    return
  }
}

</mosaic_0001>

<llo_original>
// kernel: tpu_custom_call.1
$region0: #{tpu_custom_call.1}
  #allocation0 [shape = 'u32[]', space=smem, size = 0x4, offset = 0x4, fixed_abs, tag = 'smem constant byte address 0x4 - core index']
  #allocation1 [shape = 'u32[144,128]{1,0:T(1,128)}', space=vmem, size = 0x12000, scoped, tag = 'internal scratch']
  #allocation2 [shape = 's32[3]{0}', space=sflag, size = 0xc, scoped, tag = 'scratch operand']
  #allocation3 [shape = 's32[]', space=sflag, size = 0x4, offset = 0, fixed_abs, tag = 'sflag constant byte address 0x0 - dummy sync flag']
  #allocation4 [shape = 'u32[0]{0}', space=smem, size = 0, offset = 0, fixed_abs, tag = 'smem constant byte address 0x0 - null']
  #allocation5 [shape = 's32[]', space=sflag, size = 0x4, offset = 0, fixed_abs, tag = 'sflag constant byte address 0x0 - dummy sync flag']
  #allocation6 [shape = 'u32[0]{0}', space=smem, size = 0, offset = 0, fixed_abs, tag = 'smem constant byte address 0x0 - null']
  #allocation7 [shape = 's32[]', space=sflag, size = 0x4, offset = 0, fixed_abs, tag = 'sflag constant byte address 0x0 - dummy sync flag']
  #allocation8 [shape = 'u32[0]{0}', space=smem, size = 0, offset = 0, fixed_abs, tag = 'smem constant byte address 0x0 - null']
  %s0 = inlined_call_operand.hbm [shape: f32[2,1024], index: 0, kind: input, shape index: {}]
  %s1 = inlined_call_operand.hbm [shape: f32[2,768], index: 1, kind: input, shape index: {}]
  %s2 = inlined_call_operand.hbm [shape: f32[2,1280], index: 2, kind: input, shape index: {}]
  %s3 = inlined_call_operand.hbm [shape: f32[2,3072], index: 3, kind: output, shape index: {}]
  %s4 = sld [smem:[#allocation0]]
  $region2: #{tpu_custom_call.1} parent=0
    _
  %s6 = ssub.s32 1, %s4
  %s7 = scalar_select 0, %s6, %s4
  %s9 = sshll.u32 1, 14
  %s10 = sxor.u32 4294967295, %s9
  %s13 = sshll.u32 3, 24
  %s14 = sxor.u32 4294967295, %s13
  %s15 = sand.u32 0, %s14
  %s17 = sor.u32 %s15, 0
  %20 = dma.general %s0, 256, %s3, [#allocation2], [#allocation3], [#allocation4], %s17, 0
  %s21 = scalar_lea.hbm %s3, 256
  %s22 = scalar_lea.sflag [#allocation2], 1
  %s24 = sshll.u32 1, 14
  %s25 = sxor.u32 4294967295, %s24
  %s28 = sshll.u32 3, 24
  %s29 = sxor.u32 4294967295, %s28
  %s30 = sand.u32 0, %s29
  %s32 = sor.u32 %s30, 0
  %35 = dma.general %s1, 192, %s21, %s22, [#allocation5], [#allocation6], %s32, 0
  %s36 = scalar_lea.hbm %s3, 448
  %s37 = scalar_lea.sflag [#allocation2], 2
  %s39 = sshll.u32 1, 14
  %s40 = sxor.u32 4294967295, %s39
  %s43 = sshll.u32 3, 24
  %s44 = sxor.u32 4294967295, %s43
  %s45 = sand.u32 0, %s44
  %s47 = sor.u32 %s45, 0
  %50 = dma.general %s2, 320, %s36, %s37, [#allocation7], [#allocation8], %s47, 0
  %s51 = smul.u32 2, 1
  %s52 = smul.u32 %s51, 8
  %s53 = sshll.u32 %s52, 4
  %54 = dma.done [#allocation2], %s53
  %s55 = smul.u32 %s51, 6
  %s56 = sshll.u32 %s55, 4
  %57 = dma.done %s22, %s56
  %s58 = smul.u32 %s51, 10
  %s59 = sshll.u32 %s58, 4
  %60 = dma.done %s37, %s59
  %61 = vsyncmov [#allocation2]
  %s62 = vpop.sfrf %61
  %p63 = scmp.eq.s32.totalorder %s62, 0
  %p64 = pneg %p63
  %66 = shalt.err (%p64)
  %s67 = scalar_lea.sflag [#allocation2], 1
  %68 = vsyncmov %s67
  %s69 = vpop.sfrf %68
  %p70 = scmp.eq.s32.totalorder %s69, 0
  %p71 = pneg %p70
  %73 = shalt.err (%p71)
  %s74 = scalar_lea.sflag [#allocation2], 2
  %75 = vsyncmov %s74
  %s76 = vpop.sfrf %75
  %p77 = scmp.eq.s32.totalorder %s76, 0
  %p78 = pneg %p77
  %80 = shalt.err (%p78)

</llo_original>
